<compile_context>
chip_gen: v6e
topology: v6e:2x2x1
jax: 0.10.0
libtpu: 0.0.40
codegen_flags: <defaults>
</compile_context>

<pallas_src>
import jax
import jax.numpy as jnp
from jax.experimental import pallas as pl
from jax.experimental.pallas import tpu as pltpu


def lstm_reward_kernel(x_ref, wih_ref, whh_ref, b_ref, wfc_ref, bfc_ref,
                       out_ref, xw_ref):
    """Single invocation: full LSTM recurrence + final Linear on the last h.

    x_ref   : (T*Bp, I)   time-major, batch zero-padded to Bp (multiple of 8)
    wih_ref : (I, 4H)     gate columns [i, f, o, g]
    whh_ref : (H, 4H)     gate columns [i, f, o, g]
    b_ref   : (1, 4H)
    wfc_ref : (H, A)
    bfc_ref : (1, A)
    out_ref : (Bp, A)
    xw_ref  : (T, Bp, 4H) VMEM scratch (staged input projection)
    """
    Bp = out_ref.shape[0]
    H = whh_ref.shape[0]
    T = xw_ref.shape[0]

    # ---- Hoisted input projection for ALL timesteps: one MXU matmul with the bias
    # folded in, staged into VMEM scratch so the recurrence reads a tile-aligned
    # (Bp, 4H) slab per step instead of keeping the whole thing live in vregs.
    xw_ref[...] = (
        jnp.dot(x_ref[...], wih_ref[...], preferred_element_type=jnp.float32)
        + b_ref[...]
    ).reshape(T, Bp, 4 * H)

    # ---- Serial recurrence: one MXU push (h @ W_hh) per step plus gate math.
    def step(t, carry):
        h, c = carry
        gates = xw_ref[t] + jnp.dot(
            h, whh_ref[...], preferred_element_type=jnp.float32)      # (Bp, 4H)
        # Columns are [i | f | o | g]: sigmoid over the contiguous [0, 3H) slab,
        # tanh only over [3H, 4H) -- no lane-iota select needed.
        sig = jax.nn.sigmoid(gates[:, :3 * H])
        g_g = jnp.tanh(gates[:, 3 * H:])
        i_g = sig[:, 0 * H:1 * H]
        f_g = sig[:, 1 * H:2 * H]
        o_g = sig[:, 2 * H:3 * H]
        c = f_g * c + i_g * g_g
        h = o_g * jnp.tanh(c)
        return (h, c)

    h0 = jnp.zeros((Bp, H), jnp.float32)       # h0 = c0 = zeros (matches torch.zeros)
    c0 = jnp.zeros((Bp, H), jnp.float32)
    h, _ = jax.lax.fori_loop(0, T, step, (h0, c0), unroll=True)

    # ---- Fused final Linear on the last hidden state: fc(out[:, -1, :]).
    out_ref[...] = (
        jnp.dot(h, wfc_ref[...], preferred_element_type=jnp.float32) + bfc_ref[...]
    )


def prepare_params(w_ih, w_hh, b_ih, b_hh, w_fc, b_fc):
    """One-time weight plumbing (do this at parameter-load time, not per call):
    transpose for row-major kernel matmuls, fold the two LSTM biases, and reorder
    gate blocks from PyTorch's [i, f, g, o] to [i, f, o, g]."""
    fourH = w_ih.shape[0]
    H = fourH // 4

    def reorder(w):  # rows/entries [i|f|g|o] -> [i|f|o|g] along axis 0
        return jnp.concatenate([w[0:2 * H], w[3 * H:4 * H], w[2 * H:3 * H]], axis=0)

    wih_t = jnp.transpose(reorder(w_ih)).astype(jnp.float32)            # (I, 4H)
    whh_t = jnp.transpose(reorder(w_hh)).astype(jnp.float32)            # (H, 4H)
    b = reorder((b_ih + b_hh).astype(jnp.float32)).reshape(1, fourH)    # (1, 4H)
    wfc_t = jnp.transpose(w_fc).astype(jnp.float32)                     # (H, A)
    bfc = b_fc.astype(jnp.float32).reshape(1, -1)                       # (1, A)
    return wih_t, whh_t, b, wfc_t, bfc


@jax.jit
def simple_rnn_reward_forward(x_btI, params):
    """x_btI: (B, T, I) float32, batch_first like the PyTorch module."""
    wih_t, whh_t, b, wfc_t, bfc = params
    B, T, I = x_btI.shape
    H = whh_t.shape[0]
    A = wfc_t.shape[1]

    # Pad batch to the 8-sublane height; the hardware pads to 8 anyway, and this
    # makes every per-step slice in the kernel tile-aligned.
    Bp = max(8, ((B + 7) // 8) * 8)
    xp = jnp.pad(x_btI.astype(jnp.float32), ((0, Bp - B), (0, 0), (0, 0)))
    # Time-major flatten: contiguous (Bp, I) row groups per timestep.
    x2 = jnp.transpose(xp, (1, 0, 2)).reshape(T * Bp, I)

    out = pl.pallas_call(
        lstm_reward_kernel,
        out_shape=jax.ShapeDtypeStruct((Bp, A), jnp.float32),
        in_specs=[pl.BlockSpec(memory_space=pltpu.MemorySpace.VMEM)] * 6,
        out_specs=pl.BlockSpec(memory_space=pltpu.MemorySpace.VMEM),
        scratch_shapes=[pltpu.VMEM((T, Bp, 4 * H), jnp.float32)],
    )(x2, wih_t, whh_t, b, wfc_t, bfc)

    return out[:B]


def _reference_forward(x, w_ih, w_hh, b_ih, b_hh, w_fc, b_fc):
    """Pure-JAX LSTM reference (PyTorch nn.LSTM semantics) for validation."""
    B, T, I = x.shape
    H = w_hh.shape[1]
    h = jnp.zeros((B, H), jnp.float32)
    c = jnp.zeros((B, H), jnp.float32)

    def step(carry, x_t):
        h, c = carry
        g = x_t @ w_ih.T + b_ih + h @ w_hh.T + b_hh
        i_g = jax.nn.sigmoid(g[:, 0 * H:1 * H])
        f_g = jax.nn.sigmoid(g[:, 1 * H:2 * H])
        g_g = jnp.tanh(g[:, 2 * H:3 * H])
        o_g = jax.nn.sigmoid(g[:, 3 * H:4 * H])
        c = f_g * c + i_g * g_g
        h = o_g * jnp.tanh(c)
        return (h, c), None

    (h, c), _ = jax.lax.scan(step, (h, c), jnp.transpose(x, (1, 0, 2)))
    return h @ w_fc.T + b_fc


if __name__ == "__main__":
    # Shapes implied by the module: hidden_size must be 64 (h0/c0 hardcode 64).
    B, T, I, H, A = 2, 8, 16, 64, 4

    key = jax.random.PRNGKey(0)
    ks = jax.random.split(key, 8)
    bound = 1.0 / jnp.sqrt(jnp.float32(H))   # PyTorch LSTM/Linear uniform init scale

    x = jax.random.normal(ks[0], (B, T, I), dtype=jnp.float32)
    w_ih = jax.random.uniform(ks[1], (4 * H, I), jnp.float32, -bound, bound)
    w_hh = jax.random.uniform(ks[2], (4 * H, H), jnp.float32, -bound, bound)
    b_ih = jax.random.uniform(ks[3], (4 * H,), jnp.float32, -bound, bound)
    b_hh = jax.random.uniform(ks[4], (4 * H,), jnp.float32, -bound, bound)
    w_fc = jax.random.uniform(ks[5], (A, H), jnp.float32, -bound, bound)
    b_fc = jax.random.uniform(ks[6], (A,), jnp.float32, -bound, bound)

    # One-time parameter prep (transposes / bias fold / gate reorder), then a
    # jitted forward that only does pad + transpose around the pallas_call.
    params = prepare_params(w_ih, w_hh, b_ih, b_hh, w_fc, b_fc)
    params = jax.tree_util.tree_map(jax.block_until_ready, params)

    out = simple_rnn_reward_forward(x, params)
    out = jax.block_until_ready(out)

    ref = _reference_forward(x, w_ih, w_hh, b_ih, b_hh, w_fc, b_fc)
    assert out.shape == (B, A)
    assert jnp.allclose(out, ref, atol=1e-5, rtol=1e-5), "mismatch vs reference"

    print("KERNEL_OK")
</pallas_src>

<mosaic_0001>
module attributes {stable_mosaic.version = 11 : i64} {
  func.func @lstm_reward_kernel(%arg0: memref<64x16xf32, #tpu.memory_space<vmem>>, %arg1: memref<16x256xf32, #tpu.memory_space<vmem>>, %arg2: memref<64x256xf32, #tpu.memory_space<vmem>>, %arg3: memref<1x256xf32, #tpu.memory_space<vmem>>, %arg4: memref<64x4xf32, #tpu.memory_space<vmem>>, %arg5: memref<1x4xf32, #tpu.memory_space<vmem>>, %arg6: memref<8x4xf32, #tpu.memory_space<vmem>>, %arg7: memref<8x8x256xf32, #tpu.memory_space<vmem>>) attributes {dimension_semantics = [], scalar_prefetch = 0 : i64, scratch_operands = 1 : i64, tpu.core_type = #tpu.core_type<tc>} {
    %c0 = arith.constant 0 : index
    %c0_0 = arith.constant 0 : index
    %0 = vector.load %arg0[%c0, %c0_0] : memref<64x16xf32, #tpu.memory_space<vmem>>, vector<64x16xf32>
    %c0_1 = arith.constant 0 : index
    %c0_2 = arith.constant 0 : index
    %1 = vector.load %arg1[%c0_1, %c0_2] : memref<16x256xf32, #tpu.memory_space<vmem>>, vector<16x256xf32>
    %cst = arith.constant dense<0.000000e+00> : vector<64x256xf32>
    %2 = tpu.matmul %0, %1, %cst {dimension_numbers = #tpu.dot_dimension_numbers<[1], [0], [0], [1], [0, 0, 1, 1], [], []>} : vector<64x16xf32>, vector<16x256xf32>, vector<64x256xf32> -> vector<64x256xf32>
    %c0_3 = arith.constant 0 : index
    %c0_4 = arith.constant 0 : index
    %3 = vector.load %arg3[%c0_3, %c0_4] : memref<1x256xf32, #tpu.memory_space<vmem>>, vector<1x256xf32>
    %4 = vector.broadcast %3 : vector<1x256xf32> to vector<64x256xf32>
    %5 = arith.addf %2, %4 : vector<64x256xf32>
    %6 = vector.shape_cast %5 : vector<64x256xf32> to vector<8x8x256xf32>
    %c0_5 = arith.constant 0 : index
    %c0_6 = arith.constant 0 : index
    %c0_7 = arith.constant 0 : index
    %7 = vector.load %arg7[%c0_5, %c0_6, %c0_7] : memref<8x8x256xf32, #tpu.memory_space<vmem>>, vector<8x8x256xf32>
    tpu.vector_store %arg7[%c0_5, %c0_6, %c0_7], %6 {strides = array<i32>} : memref<8x8x256xf32, #tpu.memory_space<vmem>>, vector<8x8x256xf32>,
    %cst_8 = arith.constant 0.000000e+00 : f32
    %8 = vector.broadcast %cst_8 : f32 to vector<8x64xf32>
    %cst_9 = arith.constant 0.000000e+00 : f32
    %9 = vector.broadcast %cst_9 : f32 to vector<8x64xf32>
    %c0_i32 = arith.constant 0 : i32
    %10 = arith.index_cast %c0_i32 : i32 to index
    %c0_10 = arith.constant 0 : index
    %c0_11 = arith.constant 0 : index
    %11 = vector.load %arg7[%10, %c0_10, %c0_11] : memref<8x8x256xf32, #tpu.memory_space<vmem>>, vector<1x8x256xf32>
    %12 = vector.shape_cast %11 : vector<1x8x256xf32> to vector<8x256xf32>
    %c0_12 = arith.constant 0 : index
    %c0_13 = arith.constant 0 : index
    %13 = vector.load %arg2[%c0_12, %c0_13] : memref<64x256xf32, #tpu.memory_space<vmem>>, vector<64x256xf32>
    %cst_14 = arith.constant dense<0.000000e+00> : vector<8x256xf32>
    %14 = tpu.matmul %8, %13, %cst_14 {dimension_numbers = #tpu.dot_dimension_numbers<[1], [0], [0], [1], [0, 0, 1, 1], [], []>} : vector<8x64xf32>, vector<64x256xf32>, vector<8x256xf32> -> vector<8x256xf32>
    %15 = arith.addf %12, %14 : vector<8x256xf32>
    %16 = vector.extract_strided_slice %15 {offsets = [0, 0], sizes = [8, 192], strides = [1, 1]} : vector<8x256xf32> to vector<8x192xf32>
    %17 = arith.negf %16 : vector<8x192xf32>
    %18 = math.exp %17 : vector<8x192xf32>
    %cst_15 = arith.constant 1.000000e+00 : f32
    %19 = vector.broadcast %cst_15 : f32 to vector<8x192xf32>
    %20 = arith.addf %19, %18 : vector<8x192xf32>
    %21 = arith.divf %19, %20 : vector<8x192xf32>
    %22 = vector.extract_strided_slice %15 {offsets = [0, 192], sizes = [8, 64], strides = [1, 1]} : vector<8x256xf32> to vector<8x64xf32>
    %23 = math.tanh %22 : vector<8x64xf32>
    %24 = vector.extract_strided_slice %21 {offsets = [0, 0], sizes = [8, 64], strides = [1, 1]} : vector<8x192xf32> to vector<8x64xf32>
    %25 = vector.extract_strided_slice %21 {offsets = [0, 64], sizes = [8, 64], strides = [1, 1]} : vector<8x192xf32> to vector<8x64xf32>
    %26 = vector.extract_strided_slice %21 {offsets = [0, 128], sizes = [8, 64], strides = [1, 1]} : vector<8x192xf32> to vector<8x64xf32>
    %27 = arith.mulf %25, %9 : vector<8x64xf32>
    %28 = arith.mulf %24, %23 : vector<8x64xf32>
    %29 = arith.addf %27, %28 : vector<8x64xf32>
    %30 = math.tanh %29 : vector<8x64xf32>
    %31 = arith.mulf %26, %30 : vector<8x64xf32>
    %c1_i32 = arith.constant 1 : i32
    %32 = arith.index_cast %c1_i32 : i32 to index
    %c0_16 = arith.constant 0 : index
    %c0_17 = arith.constant 0 : index
    %33 = vector.load %arg7[%32, %c0_16, %c0_17] : memref<8x8x256xf32, #tpu.memory_space<vmem>>, vector<1x8x256xf32>
    %34 = vector.shape_cast %33 : vector<1x8x256xf32> to vector<8x256xf32>
    %c0_18 = arith.constant 0 : index
    %c0_19 = arith.constant 0 : index
    %35 = vector.load %arg2[%c0_18, %c0_19] : memref<64x256xf32, #tpu.memory_space<vmem>>, vector<64x256xf32>
    %cst_20 = arith.constant dense<0.000000e+00> : vector<8x256xf32>
    %36 = tpu.matmul %31, %35, %cst_20 {dimension_numbers = #tpu.dot_dimension_numbers<[1], [0], [0], [1], [0, 0, 1, 1], [], []>} : vector<8x64xf32>, vector<64x256xf32>, vector<8x256xf32> -> vector<8x256xf32>
    %37 = arith.addf %34, %36 : vector<8x256xf32>
    %38 = vector.extract_strided_slice %37 {offsets = [0, 0], sizes = [8, 192], strides = [1, 1]} : vector<8x256xf32> to vector<8x192xf32>
    %39 = arith.negf %38 : vector<8x192xf32>
    %40 = math.exp %39 : vector<8x192xf32>
    %cst_21 = arith.constant 1.000000e+00 : f32
    %41 = vector.broadcast %cst_21 : f32 to vector<8x192xf32>
    %42 = arith.addf %41, %40 : vector<8x192xf32>
    %43 = arith.divf %41, %42 : vector<8x192xf32>
    %44 = vector.extract_strided_slice %37 {offsets = [0, 192], sizes = [8, 64], strides = [1, 1]} : vector<8x256xf32> to vector<8x64xf32>
    %45 = math.tanh %44 : vector<8x64xf32>
    %46 = vector.extract_strided_slice %43 {offsets = [0, 0], sizes = [8, 64], strides = [1, 1]} : vector<8x192xf32> to vector<8x64xf32>
    %47 = vector.extract_strided_slice %43 {offsets = [0, 64], sizes = [8, 64], strides = [1, 1]} : vector<8x192xf32> to vector<8x64xf32>
    %48 = vector.extract_strided_slice %43 {offsets = [0, 128], sizes = [8, 64], strides = [1, 1]} : vector<8x192xf32> to vector<8x64xf32>
    %49 = arith.mulf %47, %29 : vector<8x64xf32>
    %50 = arith.mulf %46, %45 : vector<8x64xf32>
    %51 = arith.addf %49, %50 : vector<8x64xf32>
    %52 = math.tanh %51 : vector<8x64xf32>
    %53 = arith.mulf %48, %52 : vector<8x64xf32>
    %c2_i32 = arith.constant 2 : i32
    %54 = arith.index_cast %c2_i32 : i32 to index
    %c0_22 = arith.constant 0 : index
    %c0_23 = arith.constant 0 : index
    %55 = vector.load %arg7[%54, %c0_22, %c0_23] : memref<8x8x256xf32, #tpu.memory_space<vmem>>, vector<1x8x256xf32>
    %56 = vector.shape_cast %55 : vector<1x8x256xf32> to vector<8x256xf32>
    %c0_24 = arith.constant 0 : index
    %c0_25 = arith.constant 0 : index
    %57 = vector.load %arg2[%c0_24, %c0_25] : memref<64x256xf32, #tpu.memory_space<vmem>>, vector<64x256xf32>
    %cst_26 = arith.constant dense<0.000000e+00> : vector<8x256xf32>
    %58 = tpu.matmul %53, %57, %cst_26 {dimension_numbers = #tpu.dot_dimension_numbers<[1], [0], [0], [1], [0, 0, 1, 1], [], []>} : vector<8x64xf32>, vector<64x256xf32>, vector<8x256xf32> -> vector<8x256xf32>
    %59 = arith.addf %56, %58 : vector<8x256xf32>
    %60 = vector.extract_strided_slice %59 {offsets = [0, 0], sizes = [8, 192], strides = [1, 1]} : vector<8x256xf32> to vector<8x192xf32>
    %61 = arith.negf %60 : vector<8x192xf32>
    %62 = math.exp %61 : vector<8x192xf32>
    %cst_27 = arith.constant 1.000000e+00 : f32
    %63 = vector.broadcast %cst_27 : f32 to vector<8x192xf32>
    %64 = arith.addf %63, %62 : vector<8x192xf32>
    %65 = arith.divf %63, %64 : vector<8x192xf32>
    %66 = vector.extract_strided_slice %59 {offsets = [0, 192], sizes = [8, 64], strides = [1, 1]} : vector<8x256xf32> to vector<8x64xf32>
    %67 = math.tanh %66 : vector<8x64xf32>
    %68 = vector.extract_strided_slice %65 {offsets = [0, 0], sizes = [8, 64], strides = [1, 1]} : vector<8x192xf32> to vector<8x64xf32>
    %69 = vector.extract_strided_slice %65 {offsets = [0, 64], sizes = [8, 64], strides = [1, 1]} : vector<8x192xf32> to vector<8x64xf32>
    %70 = vector.extract_strided_slice %65 {offsets = [0, 128], sizes = [8, 64], strides = [1, 1]} : vector<8x192xf32> to vector<8x64xf32>
    %71 = arith.mulf %69, %51 : vector<8x64xf32>
    %72 = arith.mulf %68, %67 : vector<8x64xf32>
    %73 = arith.addf %71, %72 : vector<8x64xf32>
    %74 = math.tanh %73 : vector<8x64xf32>
    %75 = arith.mulf %70, %74 : vector<8x64xf32>
    %c3_i32 = arith.constant 3 : i32
    %76 = arith.index_cast %c3_i32 : i32 to index
    %c0_28 = arith.constant 0 : index
    %c0_29 = arith.constant 0 : index
    %77 = vector.load %arg7[%76, %c0_28, %c0_29] : memref<8x8x256xf32, #tpu.memory_space<vmem>>, vector<1x8x256xf32>
    %78 = vector.shape_cast %77 : vector<1x8x256xf32> to vector<8x256xf32>
    %c0_30 = arith.constant 0 : index
    %c0_31 = arith.constant 0 : index
    %79 = vector.load %arg2[%c0_30, %c0_31] : memref<64x256xf32, #tpu.memory_space<vmem>>, vector<64x256xf32>
    %cst_32 = arith.constant dense<0.000000e+00> : vector<8x256xf32>
    %80 = tpu.matmul %75, %79, %cst_32 {dimension_numbers = #tpu.dot_dimension_numbers<[1], [0], [0], [1], [0, 0, 1, 1], [], []>} : vector<8x64xf32>, vector<64x256xf32>, vector<8x256xf32> -> vector<8x256xf32>
    %81 = arith.addf %78, %80 : vector<8x256xf32>
    %82 = vector.extract_strided_slice %81 {offsets = [0, 0], sizes = [8, 192], strides = [1, 1]} : vector<8x256xf32> to vector<8x192xf32>
    %83 = arith.negf %82 : vector<8x192xf32>
    %84 = math.exp %83 : vector<8x192xf32>
    %cst_33 = arith.constant 1.000000e+00 : f32
    %85 = vector.broadcast %cst_33 : f32 to vector<8x192xf32>
    %86 = arith.addf %85, %84 : vector<8x192xf32>
    %87 = arith.divf %85, %86 : vector<8x192xf32>
    %88 = vector.extract_strided_slice %81 {offsets = [0, 192], sizes = [8, 64], strides = [1, 1]} : vector<8x256xf32> to vector<8x64xf32>
    %89 = math.tanh %88 : vector<8x64xf32>
    %90 = vector.extract_strided_slice %87 {offsets = [0, 0], sizes = [8, 64], strides = [1, 1]} : vector<8x192xf32> to vector<8x64xf32>
    %91 = vector.extract_strided_slice %87 {offsets = [0, 64], sizes = [8, 64], strides = [1, 1]} : vector<8x192xf32> to vector<8x64xf32>
    %92 = vector.extract_strided_slice %87 {offsets = [0, 128], sizes = [8, 64], strides = [1, 1]} : vector<8x192xf32> to vector<8x64xf32>
    %93 = arith.mulf %91, %73 : vector<8x64xf32>
    %94 = arith.mulf %90, %89 : vector<8x64xf32>
    %95 = arith.addf %93, %94 : vector<8x64xf32>
    %96 = math.tanh %95 : vector<8x64xf32>
    %97 = arith.mulf %92, %96 : vector<8x64xf32>
    %c4_i32 = arith.constant 4 : i32
    %98 = arith.index_cast %c4_i32 : i32 to index
    %c0_34 = arith.constant 0 : index
    %c0_35 = arith.constant 0 : index
    %99 = vector.load %arg7[%98, %c0_34, %c0_35] : memref<8x8x256xf32, #tpu.memory_space<vmem>>, vector<1x8x256xf32>
    %100 = vector.shape_cast %99 : vector<1x8x256xf32> to vector<8x256xf32>
    %c0_36 = arith.constant 0 : index
    %c0_37 = arith.constant 0 : index
    %101 = vector.load %arg2[%c0_36, %c0_37] : memref<64x256xf32, #tpu.memory_space<vmem>>, vector<64x256xf32>
    %cst_38 = arith.constant dense<0.000000e+00> : vector<8x256xf32>
    %102 = tpu.matmul %97, %101, %cst_38 {dimension_numbers = #tpu.dot_dimension_numbers<[1], [0], [0], [1], [0, 0, 1, 1], [], []>} : vector<8x64xf32>, vector<64x256xf32>, vector<8x256xf32> -> vector<8x256xf32>
    %103 = arith.addf %100, %102 : vector<8x256xf32>
    %104 = vector.extract_strided_slice %103 {offsets = [0, 0], sizes = [8, 192], strides = [1, 1]} : vector<8x256xf32> to vector<8x192xf32>
    %105 = arith.negf %104 : vector<8x192xf32>
    %106 = math.exp %105 : vector<8x192xf32>
    %cst_39 = arith.constant 1.000000e+00 : f32
    %107 = vector.broadcast %cst_39 : f32 to vector<8x192xf32>
    %108 = arith.addf %107, %106 : vector<8x192xf32>
    %109 = arith.divf %107, %108 : vector<8x192xf32>
    %110 = vector.extract_strided_slice %103 {offsets = [0, 192], sizes = [8, 64], strides = [1, 1]} : vector<8x256xf32> to vector<8x64xf32>
    %111 = math.tanh %110 : vector<8x64xf32>
    %112 = vector.extract_strided_slice %109 {offsets = [0, 0], sizes = [8, 64], strides = [1, 1]} : vector<8x192xf32> to vector<8x64xf32>
    %113 = vector.extract_strided_slice %109 {offsets = [0, 64], sizes = [8, 64], strides = [1, 1]} : vector<8x192xf32> to vector<8x64xf32>
    %114 = vector.extract_strided_slice %109 {offsets = [0, 128], sizes = [8, 64], strides = [1, 1]} : vector<8x192xf32> to vector<8x64xf32>
    %115 = arith.mulf %113, %95 : vector<8x64xf32>
    %116 = arith.mulf %112, %111 : vector<8x64xf32>
    %117 = arith.addf %115, %116 : vector<8x64xf32>
    %118 = math.tanh %117 : vector<8x64xf32>
    %119 = arith.mulf %114, %118 : vector<8x64xf32>
    %c5_i32 = arith.constant 5 : i32
    %120 = arith.index_cast %c5_i32 : i32 to index
    %c0_40 = arith.constant 0 : index
    %c0_41 = arith.constant 0 : index
    %121 = vector.load %arg7[%120, %c0_40, %c0_41] : memref<8x8x256xf32, #tpu.memory_space<vmem>>, vector<1x8x256xf32>
    %122 = vector.shape_cast %121 : vector<1x8x256xf32> to vector<8x256xf32>
    %c0_42 = arith.constant 0 : index
    %c0_43 = arith.constant 0 : index
    %123 = vector.load %arg2[%c0_42, %c0_43] : memref<64x256xf32, #tpu.memory_space<vmem>>, vector<64x256xf32>
    %cst_44 = arith.constant dense<0.000000e+00> : vector<8x256xf32>
    %124 = tpu.matmul %119, %123, %cst_44 {dimension_numbers = #tpu.dot_dimension_numbers<[1], [0], [0], [1], [0, 0, 1, 1], [], []>} : vector<8x64xf32>, vector<64x256xf32>, vector<8x256xf32> -> vector<8x256xf32>
    %125 = arith.addf %122, %124 : vector<8x256xf32>
    %126 = vector.extract_strided_slice %125 {offsets = [0, 0], sizes = [8, 192], strides = [1, 1]} : vector<8x256xf32> to vector<8x192xf32>
    %127 = arith.negf %126 : vector<8x192xf32>
    %128 = math.exp %127 : vector<8x192xf32>
    %cst_45 = arith.constant 1.000000e+00 : f32
    %129 = vector.broadcast %cst_45 : f32 to vector<8x192xf32>
    %130 = arith.addf %129, %128 : vector<8x192xf32>
    %131 = arith.divf %129, %130 : vector<8x192xf32>
    %132 = vector.extract_strided_slice %125 {offsets = [0, 192], sizes = [8, 64], strides = [1, 1]} : vector<8x256xf32> to vector<8x64xf32>
    %133 = math.tanh %132 : vector<8x64xf32>
    %134 = vector.extract_strided_slice %131 {offsets = [0, 0], sizes = [8, 64], strides = [1, 1]} : vector<8x192xf32> to vector<8x64xf32>
    %135 = vector.extract_strided_slice %131 {offsets = [0, 64], sizes = [8, 64], strides = [1, 1]} : vector<8x192xf32> to vector<8x64xf32>
    %136 = vector.extract_strided_slice %131 {offsets = [0, 128], sizes = [8, 64], strides = [1, 1]} : vector<8x192xf32> to vector<8x64xf32>
    %137 = arith.mulf %135, %117 : vector<8x64xf32>
    %138 = arith.mulf %134, %133 : vector<8x64xf32>
    %139 = arith.addf %137, %138 : vector<8x64xf32>
    %140 = math.tanh %139 : vector<8x64xf32>
    %141 = arith.mulf %136, %140 : vector<8x64xf32>
    %c6_i32 = arith.constant 6 : i32
    %142 = arith.index_cast %c6_i32 : i32 to index
    %c0_46 = arith.constant 0 : index
    %c0_47 = arith.constant 0 : index
    %143 = vector.load %arg7[%142, %c0_46, %c0_47] : memref<8x8x256xf32, #tpu.memory_space<vmem>>, vector<1x8x256xf32>
    %144 = vector.shape_cast %143 : vector<1x8x256xf32> to vector<8x256xf32>
    %c0_48 = arith.constant 0 : index
    %c0_49 = arith.constant 0 : index
    %145 = vector.load %arg2[%c0_48, %c0_49] : memref<64x256xf32, #tpu.memory_space<vmem>>, vector<64x256xf32>
    %cst_50 = arith.constant dense<0.000000e+00> : vector<8x256xf32>
    %146 = tpu.matmul %141, %145, %cst_50 {dimension_numbers = #tpu.dot_dimension_numbers<[1], [0], [0], [1], [0, 0, 1, 1], [], []>} : vector<8x64xf32>, vector<64x256xf32>, vector<8x256xf32> -> vector<8x256xf32>
    %147 = arith.addf %144, %146 : vector<8x256xf32>
    %148 = vector.extract_strided_slice %147 {offsets = [0, 0], sizes = [8, 192], strides = [1, 1]} : vector<8x256xf32> to vector<8x192xf32>
    %149 = arith.negf %148 : vector<8x192xf32>
    %150 = math.exp %149 : vector<8x192xf32>
    %cst_51 = arith.constant 1.000000e+00 : f32
    %151 = vector.broadcast %cst_51 : f32 to vector<8x192xf32>
    %152 = arith.addf %151, %150 : vector<8x192xf32>
    %153 = arith.divf %151, %152 : vector<8x192xf32>
    %154 = vector.extract_strided_slice %147 {offsets = [0, 192], sizes = [8, 64], strides = [1, 1]} : vector<8x256xf32> to vector<8x64xf32>
    %155 = math.tanh %154 : vector<8x64xf32>
    %156 = vector.extract_strided_slice %153 {offsets = [0, 0], sizes = [8, 64], strides = [1, 1]} : vector<8x192xf32> to vector<8x64xf32>
    %157 = vector.extract_strided_slice %153 {offsets = [0, 64], sizes = [8, 64], strides = [1, 1]} : vector<8x192xf32> to vector<8x64xf32>
    %158 = vector.extract_strided_slice %153 {offsets = [0, 128], sizes = [8, 64], strides = [1, 1]} : vector<8x192xf32> to vector<8x64xf32>
    %159 = arith.mulf %157, %139 : vector<8x64xf32>
    %160 = arith.mulf %156, %155 : vector<8x64xf32>
    %161 = arith.addf %159, %160 : vector<8x64xf32>
    %162 = math.tanh %161 : vector<8x64xf32>
    %163 = arith.mulf %158, %162 : vector<8x64xf32>
    %c7_i32 = arith.constant 7 : i32
    %164 = arith.index_cast %c7_i32 : i32 to index
    %c0_52 = arith.constant 0 : index
    %c0_53 = arith.constant 0 : index
    %165 = vector.load %arg7[%164, %c0_52, %c0_53] : memref<8x8x256xf32, #tpu.memory_space<vmem>>, vector<1x8x256xf32>
    %166 = vector.shape_cast %165 : vector<1x8x256xf32> to vector<8x256xf32>
    %c0_54 = arith.constant 0 : index
    %c0_55 = arith.constant 0 : index
    %167 = vector.load %arg2[%c0_54, %c0_55] : memref<64x256xf32, #tpu.memory_space<vmem>>, vector<64x256xf32>
    %cst_56 = arith.constant dense<0.000000e+00> : vector<8x256xf32>
    %168 = tpu.matmul %163, %167, %cst_56 {dimension_numbers = #tpu.dot_dimension_numbers<[1], [0], [0], [1], [0, 0, 1, 1], [], []>} : vector<8x64xf32>, vector<64x256xf32>, vector<8x256xf32> -> vector<8x256xf32>
    %169 = arith.addf %166, %168 : vector<8x256xf32>
    %170 = vector.extract_strided_slice %169 {offsets = [0, 0], sizes = [8, 192], strides = [1, 1]} : vector<8x256xf32> to vector<8x192xf32>
    %171 = arith.negf %170 : vector<8x192xf32>
    %172 = math.exp %171 : vector<8x192xf32>
    %cst_57 = arith.constant 1.000000e+00 : f32
    %173 = vector.broadcast %cst_57 : f32 to vector<8x192xf32>
    %174 = arith.addf %173, %172 : vector<8x192xf32>
    %175 = arith.divf %173, %174 : vector<8x192xf32>
    %176 = vector.extract_strided_slice %169 {offsets = [0, 192], sizes = [8, 64], strides = [1, 1]} : vector<8x256xf32> to vector<8x64xf32>
    %177 = math.tanh %176 : vector<8x64xf32>
    %178 = vector.extract_strided_slice %175 {offsets = [0, 0], sizes = [8, 64], strides = [1, 1]} : vector<8x192xf32> to vector<8x64xf32>
    %179 = vector.extract_strided_slice %175 {offsets = [0, 64], sizes = [8, 64], strides = [1, 1]} : vector<8x192xf32> to vector<8x64xf32>
    %180 = vector.extract_strided_slice %175 {offsets = [0, 128], sizes = [8, 64], strides = [1, 1]} : vector<8x192xf32> to vector<8x64xf32>
    %181 = arith.mulf %179, %161 : vector<8x64xf32>
    %182 = arith.mulf %178, %177 : vector<8x64xf32>
    %183 = arith.addf %181, %182 : vector<8x64xf32>
    %184 = math.tanh %183 : vector<8x64xf32>
    %185 = arith.mulf %180, %184 : vector<8x64xf32>
    %c8_i32 = arith.constant 8 : i32
    %c0_58 = arith.constant 0 : index
    %c0_59 = arith.constant 0 : index
    %186 = vector.load %arg4[%c0_58, %c0_59] : memref<64x4xf32, #tpu.memory_space<vmem>>, vector<64x4xf32>
    %cst_60 = arith.constant dense<0.000000e+00> : vector<8x4xf32>
    %187 = tpu.matmul %185, %186, %cst_60 {dimension_numbers = #tpu.dot_dimension_numbers<[1], [0], [0], [1], [0, 0, 1, 1], [], []>} : vector<8x64xf32>, vector<64x4xf32>, vector<8x4xf32> -> vector<8x4xf32>
    %c0_61 = arith.constant 0 : index
    %c0_62 = arith.constant 0 : index
    %188 = vector.load %arg5[%c0_61, %c0_62] : memref<1x4xf32, #tpu.memory_space<vmem>>, vector<1x4xf32>
    %189 = vector.broadcast %188 : vector<1x4xf32> to vector<8x4xf32>
    %190 = arith.addf %187, %189 : vector<8x4xf32>
    %c0_63 = arith.constant 0 : index
    %c0_64 = arith.constant 0 : index
    %191 = vector.load %arg6[%c0_63, %c0_64] : memref<8x4xf32, #tpu.memory_space<vmem>>, vector<8x4xf32>
    tpu.vector_store %arg6[%c0_63, %c0_64], %190 {strides = array<i32>} : memref<8x4xf32, #tpu.memory_space<vmem>>, vector<8x4xf32>,
    return
  }
}

</mosaic_0001>

<llo_original>
// kernel: simple_rnn_reward_forward.1
$region0: #{simple_rnn_reward_forward.1}
  #allocation0 [shape = 'u32[]', space=smem, size = 0x4, offset = 0x4, fixed_abs, tag = 'smem constant byte address 0x4 - core index']
  #allocation1 [shape = 'u32[144,128]{1,0:T(1,128)}', space=vmem, size = 0x12000, scoped, tag = 'internal scratch']
  #allocation2 [shape = 'f32[8,8,256]{2,1,0:T(8,128)}', space=vmem, size = 0x10000, scoped, tag = 'scratch operand']
  %s0 = inlined_call_operand.vmem [shape: f32[64,16], index: 0, kind: input, shape index: {}]
  %s1 = inlined_call_operand.vmem [shape: f32[16,256], index: 1, kind: input, shape index: {}]
  %s2 = inlined_call_operand.vmem [shape: f32[64,256], index: 2, kind: input, shape index: {}]
  %s3 = inlined_call_operand.vmem [shape: f32[1,256], index: 3, kind: input, shape index: {}]
  %s4 = inlined_call_operand.vmem [shape: f32[64,4], index: 4, kind: input, shape index: {}]
  %s5 = inlined_call_operand.vmem [shape: f32[1,4], index: 5, kind: input, shape index: {}]
  %s6 = inlined_call_operand.vmem [shape: f32[8,4], index: 6, kind: output, shape index: {}]
  %s7 = sld [smem:[#allocation0]]
  $region34: #{simple_rnn_reward_forward.1} parent=0
    _
  %s9 = ssub.s32 1, %s7
  %s10 = scalar_select 0, %s9, %s7
  // Predicated region
  $region2: #{simple_rnn_reward_forward.1} parent=0 // pred_check
    _
  $region3: #{simple_rnn_reward_forward.1} parent=0 // pred_check_branch
    %12 = sbr.rel (0) target = $region5
  $region4: #{simple_rnn_reward_forward.1} parent=0 // pred_region
    _
  $region5: #{simple_rnn_reward_forward.1} parent=0 // pred_fallthru
    _
  // Predicated region
  $region6: #{simple_rnn_reward_forward.1} parent=0 // pred_check
    _
  $region7: #{simple_rnn_reward_forward.1} parent=0 // pred_check_branch
    %14 = sbr.rel (0) target = $region9
  $region8: #{simple_rnn_reward_forward.1} parent=0 // pred_region
    _
  $region9: #{simple_rnn_reward_forward.1} parent=0 // pred_fallthru
    _
  // Predicated region
  $region10: #{simple_rnn_reward_forward.1} parent=0 // pred_check
    _
  $region11: #{simple_rnn_reward_forward.1} parent=0 // pred_check_branch
    %16 = sbr.rel (0) target = $region13
  $region12: #{simple_rnn_reward_forward.1} parent=0 // pred_region
    _
  $region13: #{simple_rnn_reward_forward.1} parent=0 // pred_fallthru
    _
  // Predicated region
  $region14: #{simple_rnn_reward_forward.1} parent=0 // pred_check
    _
  $region15: #{simple_rnn_reward_forward.1} parent=0 // pred_check_branch
    %18 = sbr.rel (0) target = $region17
  $region16: #{simple_rnn_reward_forward.1} parent=0 // pred_region
    _
  $region17: #{simple_rnn_reward_forward.1} parent=0 // pred_fallthru
    _
  // Predicated region
  $region18: #{simple_rnn_reward_forward.1} parent=0 // pred_check
    _
  $region19: #{simple_rnn_reward_forward.1} parent=0 // pred_check_branch
    %20 = sbr.rel (0) target = $region21
  $region20: #{simple_rnn_reward_forward.1} parent=0 // pred_region
    _
  $region21: #{simple_rnn_reward_forward.1} parent=0 // pred_fallthru
    _
  // Predicated region
  $region22: #{simple_rnn_reward_forward.1} parent=0 // pred_check
    _
  $region23: #{simple_rnn_reward_forward.1} parent=0 // pred_check_branch
    %22 = sbr.rel (0) target = $region25
  $region24: #{simple_rnn_reward_forward.1} parent=0 // pred_region
    _
  $region25: #{simple_rnn_reward_forward.1} parent=0 // pred_fallthru
    _
  %v23 = vld [vmem:[%s0] sm:$0xff]
  %v24 = vld [vmem:[%s0 + $0x8] sm:$0xff]
  %v25 = vld [vmem:[%s0 + $0x10] sm:$0xff]
  %v26 = vld [vmem:[%s0 + $0x18] sm:$0xff]
  %v27 = vld [vmem:[%s0 + $0x20] sm:$0xff]
  %v28 = vld [vmem:[%s0 + $0x28] sm:$0xff]
  %v29 = vld [vmem:[%s0 + $0x30] sm:$0xff]
  %v30 = vld [vmem:[%s0 + $0x38] sm:$0xff]
  %v31 = vld [vmem:[%s1] sm:$0xff]
  %v32 = vld [vmem:[%s1 + $0x8] sm:$0xff]
  %v33 = vld [vmem:[%s1 + $0x10] sm:$0xff]
  %v34 = vld [vmem:[%s1 + $0x18] sm:$0xff]
  %v35 = vld [vmem:[%s3] sm:$0x3]
  %v37 = vlaneseq
  %v38 = vshrl.u32 %v37, 7
  %v39 = vsub.s32 0, %v38
  %v40 = vrot.slane %v35, %v39
  %v41 = vlaneseq
  %v42 = vshrl.u32 %v41, 7
  %v43 = vsub.s32 1, %v42
  %v44 = vrot.slane %v35, %v43
  %vm47 = vcmask 130048
  %v49 = vsel %vm47, %v23, 0
  %v52 = vsel %vm47, %v24, 0
  %v55 = vsel %vm47, %v25, 0
  %v58 = vsel %vm47, %v26, 0
  %v61 = vsel %vm47, %v27, 0
  %v64 = vsel %vm47, %v28, 0
  %v67 = vsel %vm47, %v29, 0
  %v70 = vsel %vm47, %v30, 0
  %72 = vmatprep.subr.mxu0 0.0
  %73 = vmatpush1.msra.mxu0 0.0
  %74 = vmatprep.subr.mxu0 0.0
  %75 = vmatpush1.msra.mxu0 0.0
  %76 = vmatprep.subr.mxu0 0.0
  %77 = vmatpush1.msra.mxu0 0.0
  %78 = vmatprep.subr.mxu0 0.0
  %79 = vmatpush1.msra.mxu0 0.0
  %80 = vmatprep.subr.mxu0 0.0
  %81 = vmatpush1.msra.mxu0 0.0
  %82 = vmatprep.subr.mxu0 0.0
  %83 = vmatpush1.msra.mxu0 0.0
  %84 = vmatprep.subr.mxu0 0.0
  %85 = vmatpush1.msra.mxu0 0.0
  %86 = vmatprep.subr.mxu0 0.0
  %87 = vmatpush1.msra.mxu0 0.0
  %88 = vmatprep.subr.mxu0 0.0
  %89 = vmatpush1.msra.mxu0 0.0
  %90 = vmatprep.subr.mxu0 0.0
  %91 = vmatpush1.msra.mxu0 0.0
  %92 = vmatprep.subr.mxu0 0.0
  %93 = vmatpush1.msra.mxu0 0.0
  %94 = vmatprep.subr.mxu0 0.0
  %95 = vmatpush1.msra.mxu0 0.0
  %96 = vmatprep.subr.mxu0 0.0
  %97 = vmatpush1.msra.mxu0 0.0
  %98 = vmatprep.subr.mxu0 0.0
  %99 = vmatpush1.msra.mxu0 0.0
  %100 = vmatprep.subr.mxu0 %v34
  %101 = vmatpush1.msra.mxu0 %v33
  %102 = vmatprep.subr.mxu0 %v32
  %103 = vmatpush1.msra.mxu0 %v31
  %104 = vmatprep.subr.mxu0 0.0
  %105 = vmatpush2.msra.mxu0 0.0
  %106 = vmatprep.subr.mxu0 0.0
  %107 = vmatpush2.msra.mxu0 0.0
  %108 = vmatprep.subr.mxu0 0.0
  %109 = vmatpush2.msra.mxu0 0.0
  %110 = vmatprep.subr.mxu0 0.0
  %111 = vmatpush2.msra.mxu0 0.0
  %112 = vmatprep.subr.mxu0 0.0
  %113 = vmatpush2.msra.mxu0 0.0
  %114 = vmatprep.subr.mxu0 0.0
  %115 = vmatpush2.msra.mxu0 0.0
  %116 = vmatprep.subr.mxu0 0.0
  %117 = vmatpush2.msra.mxu0 0.0
  %118 = vmatprep.subr.mxu0 0.0
  %119 = vmatpush2.msra.mxu0 0.0
  %120 = vmatprep.subr.mxu0 0.0
  %121 = vmatpush2.msra.mxu0 0.0
  %122 = vmatprep.subr.mxu0 0.0
  %123 = vmatpush2.msra.mxu0 0.0
  %124 = vmatprep.subr.mxu0 0.0
  %125 = vmatpush2.msra.mxu0 0.0
  %126 = vmatprep.subr.mxu0 0.0
  %127 = vmatpush2.msra.mxu0 0.0
  %128 = vmatprep.subr.mxu0 0.0
  %129 = vmatpush2.msra.mxu0 0.0
  %130 = vmatprep.subr.mxu0 0.0
  %131 = vmatpush2.msra.mxu0 0.0
  %132 = vmatprep.subr.mxu0 0.0
  %133 = vmatpush2.msra.mxu0 0.0
  %134 = vmatprep.subr.mxu0 0.0
  %135 = vmatpush2.msra.mxu0 0.0
  %136 = vmatprep.mubr.f32.mxu0 0.0
  %137 = vmatmul.mubr.f32.gmra.mxu0 %v49
  %v138 = vpop.f32.mrf.mxu0
  %v139 = vadd.f32 %v40, %v138
  %v140 = vpop.f32.mrf.mxu0
  %v141 = vadd.f32 %v44, %v140
  %142 = vmatprep.mubr.f32.mxu0 0.0
  %143 = vmatmul.mubr.f32.gmra.mxu0 %v52
  %v144 = vpop.f32.mrf.mxu0
  %v145 = vadd.f32 %v40, %v144
  %v146 = vpop.f32.mrf.mxu0
  %v147 = vadd.f32 %v44, %v146
  %148 = vmatprep.mubr.f32.mxu0 0.0
  %149 = vmatmul.mubr.f32.gmra.mxu0 %v55
  %v150 = vpop.f32.mrf.mxu0
  %v151 = vadd.f32 %v40, %v150
  %v152 = vpop.f32.mrf.mxu0
  %v153 = vadd.f32 %v44, %v152
  %154 = vmatprep.mubr.f32.mxu0 0.0
  %155 = vmatmul.mubr.f32.gmra.mxu0 %v58
  %v156 = vpop.f32.mrf.mxu0
  %v157 = vadd.f32 %v40, %v156
  %v158 = vpop.f32.mrf.mxu0
  %v159 = vadd.f32 %v44, %v158
  %160 = vmatprep.mubr.f32.mxu0 0.0
  %161 = vmatmul.mubr.f32.gmra.mxu0 %v61
  %v162 = vpop.f32.mrf.mxu0
  %v163 = vadd.f32 %v40, %v162
  %v164 = vpop.f32.mrf.mxu0
  %v165 = vadd.f32 %v44, %v164
  %166 = vmatprep.mubr.f32.mxu0 0.0
  %167 = vmatmul.mubr.f32.gmra.mxu0 %v64
  %v168 = vpop.f32.mrf.mxu0
  %v169 = vadd.f32 %v40, %v168
  %v170 = vpop.f32.mrf.mxu0
  %v171 = vadd.f32 %v44, %v170
  %172 = vmatprep.mubr.f32.mxu0 0.0
  %173 = vmatmul.mubr.f32.gmra.mxu0 %v67
  %v174 = vpop.f32.mrf.mxu0
  %v175 = vadd.f32 %v40, %v174
  %v176 = vpop.f32.mrf.mxu0
  %v177 = vadd.f32 %v44, %v176
  %178 = vmatprep.mubr.f32.mxu0 0.0
  %179 = vmatmul.mubr.f32.gmra.mxu0 %v70
  %v180 = vpop.f32.mrf.mxu0
  %v181 = vadd.f32 %v40, %v180
  %v182 = vpop.f32.mrf.mxu0
  %v183 = vadd.f32 %v44, %v182
  %184 = vdwg.mxu0
  %185 = vst [vmem:[#allocation2] sm:$0xff] %v139
  %186 = vst [vmem:[#allocation2 + $0x8] sm:$0xff] %v141
  %187 = vst [vmem:[#allocation2 + $0x10] sm:$0xff] %v145
  %188 = vst [vmem:[#allocation2 + $0x18] sm:$0xff] %v147
  %189 = vst [vmem:[#allocation2 + $0x20] sm:$0xff] %v151
  %190 = vst [vmem:[#allocation2 + $0x28] sm:$0xff] %v153
  %191 = vst [vmem:[#allocation2 + $0x30] sm:$0xff] %v157
  %192 = vst [vmem:[#allocation2 + $0x38] sm:$0xff] %v159
  %193 = vst [vmem:[#allocation2 + $0x40] sm:$0xff] %v163
  %194 = vst [vmem:[#allocation2 + $0x48] sm:$0xff] %v165
  %195 = vst [vmem:[#allocation2 + $0x50] sm:$0xff] %v169
  %196 = vst [vmem:[#allocation2 + $0x58] sm:$0xff] %v171
  %197 = vst [vmem:[#allocation2 + $0x60] sm:$0xff] %v175
  %198 = vst [vmem:[#allocation2 + $0x68] sm:$0xff] %v177
  %199 = vst [vmem:[#allocation2 + $0x70] sm:$0xff] %v181
  %200 = vst [vmem:[#allocation2 + $0x78] sm:$0xff] %v183
  %v201 = vld [vmem:[#allocation2] sm:$0xff]
  %v202 = vld [vmem:[#allocation2 + $0x8] sm:$0xff]
  %v203 = vld [vmem:[%s2] sm:$0xff]
  %v204 = vld [vmem:[%s2 + $0x8] sm:$0xff]
  %v205 = vld [vmem:[%s2 + $0x10] sm:$0xff]
  %v206 = vld [vmem:[%s2 + $0x18] sm:$0xff]
  %v207 = vld [vmem:[%s2 + $0x20] sm:$0xff]
  %v208 = vld [vmem:[%s2 + $0x28] sm:$0xff]
  %v209 = vld [vmem:[%s2 + $0x30] sm:$0xff]
  %v210 = vld [vmem:[%s2 + $0x38] sm:$0xff]
  %v211 = vld [vmem:[%s2 + $0x40] sm:$0xff]
  %v212 = vld [vmem:[%s2 + $0x48] sm:$0xff]
  %v213 = vld [vmem:[%s2 + $0x50] sm:$0xff]
  %v214 = vld [vmem:[%s2 + $0x58] sm:$0xff]
  %v215 = vld [vmem:[%s2 + $0x60] sm:$0xff]
  %v216 = vld [vmem:[%s2 + $0x68] sm:$0xff]
  %v217 = vld [vmem:[%s2 + $0x70] sm:$0xff]
  %v218 = vld [vmem:[%s2 + $0x78] sm:$0xff]
  %vm219 = vcmask 523264
  %v221 = vsel %vm219, 0.0, 0
  %223 = vmatprep.subr.mxu0 0.0
  %224 = vmatpush1.msra.mxu0 0.0
  %225 = vmatprep.subr.mxu0 0.0
  %226 = vmatpush1.msra.mxu0 0.0
  %227 = vmatprep.subr.mxu0 0.0
  %228 = vmatpush1.msra.mxu0 0.0
  %229 = vmatprep.subr.mxu0 0.0
  %230 = vmatpush1.msra.mxu0 0.0
  %231 = vmatprep.subr.mxu0 0.0
  %232 = vmatpush1.msra.mxu0 0.0
  %233 = vmatprep.subr.mxu0 0.0
  %234 = vmatpush1.msra.mxu0 0.0
  %235 = vmatprep.subr.mxu0 0.0
  %236 = vmatpush1.msra.mxu0 0.0
  %237 = vmatprep.subr.mxu0 0.0
  %238 = vmatpush1.msra.mxu0 0.0
  %239 = vmatprep.subr.mxu0 %v218
  %240 = vmatpush1.msra.mxu0 %v217
  %241 = vmatprep.subr.mxu0 %v216
  %242 = vmatpush1.msra.mxu0 %v215
  %243 = vmatprep.subr.mxu0 %v214
  %244 = vmatpush1.msra.mxu0 %v213
  %245 = vmatprep.subr.mxu0 %v212
  %246 = vmatpush1.msra.mxu0 %v211
  %247 = vmatprep.subr.mxu0 %v210
  %248 = vmatpush1.msra.mxu0 %v209
  %249 = vmatprep.subr.mxu0 %v208
  %250 = vmatpush1.msra.mxu0 %v207
  %251 = vmatprep.subr.mxu0 %v206
  %252 = vmatpush1.msra.mxu0 %v205
  %253 = vmatprep.subr.mxu0 %v204
  %254 = vmatpush1.msra.mxu0 %v203
  %255 = vmatprep.subr.mxu0 0.0
  %256 = vmatpush2.msra.mxu0 0.0
  %257 = vmatprep.subr.mxu0 0.0
  %258 = vmatpush2.msra.mxu0 0.0
  %259 = vmatprep.subr.mxu0 0.0
  %260 = vmatpush2.msra.mxu0 0.0
  %261 = vmatprep.subr.mxu0 0.0
  %262 = vmatpush2.msra.mxu0 0.0
  %263 = vmatprep.subr.mxu0 0.0
  %264 = vmatpush2.msra.mxu0 0.0
  %265 = vmatprep.subr.mxu0 0.0
  %266 = vmatpush2.msra.mxu0 0.0
  %267 = vmatprep.subr.mxu0 0.0
  %268 = vmatpush2.msra.mxu0 0.0
  %269 = vmatprep.subr.mxu0 0.0
  %270 = vmatpush2.msra.mxu0 0.0
  %271 = vmatprep.subr.mxu0 0.0
  %272 = vmatpush2.msra.mxu0 0.0
  %273 = vmatprep.subr.mxu0 0.0
  %274 = vmatpush2.msra.mxu0 0.0
  %275 = vmatprep.subr.mxu0 0.0
  %276 = vmatpush2.msra.mxu0 0.0
  %277 = vmatprep.subr.mxu0 0.0
  %278 = vmatpush2.msra.mxu0 0.0
  %279 = vmatprep.subr.mxu0 0.0
  %280 = vmatpush2.msra.mxu0 0.0
  %281 = vmatprep.subr.mxu0 0.0
  %282 = vmatpush2.msra.mxu0 0.0
  %283 = vmatprep.subr.mxu0 0.0
  %284 = vmatpush2.msra.mxu0 0.0
  %285 = vmatprep.subr.mxu0 0.0
  %286 = vmatpush2.msra.mxu0 0.0
  %287 = vmatprep.mubr.f32.mxu0 0.0
  %288 = vmatmul.mubr.f32.gmra.mxu0 %v221
  %v289 = vpop.f32.mrf.mxu0
  %v290 = vadd.f32 0.0, %v289
  %v291 = vpop.f32.mrf.mxu0
  %v292 = vadd.f32 0.0, %v291
  %293 = vdwg.mxu0
  %v294 = vadd.f32 %v201, %v290
  %v295 = vadd.f32 %v202, %v292
  %v296 = vxor.u32 %v294, 2147483648
  %v297 = vxor.u32 %v295, 2147483648
  %v298 = vmul.f32 %v296, 1.442695
  %v299 = vpow.pop %v298
  %v300 = vmul.f32 %v297, 1.442695
  %v301 = vpow.pop %v300
  %v302 = vadd.f32 %v299, 1.0
  %v303 = vadd.f32 %v301, 1.0
  %v304 = vrcp.pop %v302
  %v305 = vmul.f32 1.0, %v304
  %v306 = vrcp.pop %v303
  %v307 = vmul.f32 1.0, %v306
  %v308 = vtanh.pop %v295
  %v309 = vmul.f32 %v305, 0.0
  %311 = vrot.lane.b32.xlu0 %v308, 64
  %v312 = vpop.permute.xlu0 %311
  %v314 = vmul.f32 %v305, %v312
  %316 = vrot.lane.b32.xlu0 %v314, 64
  %v317 = vpop.permute.xlu0 %316
  %v319 = vadd.f32 %v309, %v317
  %v320 = vtanh.pop %v319
  %322 = vrot.lane.b32.xlu0 %v320, 64
  %v323 = vpop.permute.xlu0 %322
  %v325 = vmul.f32 %v307, %v323
  %s326 = scalar_lea.vmem [#allocation2], 16
  %v327 = vld [vmem:[%s326] sm:$0xff]
  %v328 = vld [vmem:[%s326 + $0x8] sm:$0xff]
  %v330 = vsel %vm219, %v325, 0
  %332 = vmatprep.subr.mxu0 0.0
  %333 = vmatpush1.msra.mxu0 0.0
  %334 = vmatprep.subr.mxu0 0.0
  %335 = vmatpush1.msra.mxu0 0.0
  %336 = vmatprep.subr.mxu0 0.0
  %337 = vmatpush1.msra.mxu0 0.0
  %338 = vmatprep.subr.mxu0 0.0
  %339 = vmatpush1.msra.mxu0 0.0
  %340 = vmatprep.subr.mxu0 0.0
  %341 = vmatpush1.msra.mxu0 0.0
  %342 = vmatprep.subr.mxu0 0.0
  %343 = vmatpush1.msra.mxu0 0.0
  %344 = vmatprep.subr.mxu0 0.0
  %345 = vmatpush1.msra.mxu0 0.0
  %346 = vmatprep.subr.mxu0 0.0
  %347 = vmatpush1.msra.mxu0 0.0
  %348 = vmatprep.subr.mxu0 %v218
  %349 = vmatpush1.msra.mxu0 %v217
  %350 = vmatprep.subr.mxu0 %v216
  %351 = vmatpush1.msra.mxu0 %v215
  %352 = vmatprep.subr.mxu0 %v214
  %353 = vmatpush1.msra.mxu0 %v213
  %354 = vmatprep.subr.mxu0 %v212
  %355 = vmatpush1.msra.mxu0 %v211
  %356 = vmatprep.subr.mxu0 %v210
  %357 = vmatpush1.msra.mxu0 %v209
  %358 = vmatprep.subr.mxu0 %v208
  %359 = vmatpush1.msra.mxu0 %v207
  %360 = vmatprep.subr.mxu0 %v206
  %361 = vmatpush1.msra.mxu0 %v205
  %362 = vmatprep.subr.mxu0 %v204
  %363 = vmatpush1.msra.mxu0 %v203
  %364 = vmatprep.subr.mxu0 0.0
  %365 = vmatpush2.msra.mxu0 0.0
  %366 = vmatprep.subr.mxu0 0.0
  %367 = vmatpush2.msra.mxu0 0.0
  %368 = vmatprep.subr.mxu0 0.0
  %369 = vmatpush2.msra.mxu0 0.0
  %370 = vmatprep.subr.mxu0 0.0
  %371 = vmatpush2.msra.mxu0 0.0
  %372 = vmatprep.subr.mxu0 0.0
  %373 = vmatpush2.msra.mxu0 0.0
  %374 = vmatprep.subr.mxu0 0.0
  %375 = vmatpush2.msra.mxu0 0.0
  %376 = vmatprep.subr.mxu0 0.0
  %377 = vmatpush2.msra.mxu0 0.0
  %378 = vmatprep.subr.mxu0 0.0
  %379 = vmatpush2.msra.mxu0 0.0
  %380 = vmatprep.subr.mxu0 0.0
  %381 = vmatpush2.msra.mxu0 0.0
  %382 = vmatprep.subr.mxu0 0.0
  %383 = vmatpush2.msra.mxu0 0.0
  %384 = vmatprep.subr.mxu0 0.0
  %385 = vmatpush2.msra.mxu0 0.0
  %386 = vmatprep.subr.mxu0 0.0
  %387 = vmatpush2.msra.mxu0 0.0
  %388 = vmatprep.subr.mxu0 0.0
  %389 = vmatpush2.msra.mxu0 0.0
  %390 = vmatprep.subr.mxu0 0.0
  %391 = vmatpush2.msra.mxu0 0.0
  %392 = vmatprep.subr.mxu0 0.0
  %393 = vmatpush2.msra.mxu0 0.0
  %394 = vmatprep.subr.mxu0 0.0
  %395 = vmatpush2.msra.mxu0 0.0
  %396 = vmatprep.mubr.f32.mxu0 0.0
  %397 = vmatmul.mubr.f32.gmra.mxu0 %v330
  %v398 = vpop.f32.mrf.mxu0
  %v399 = vadd.f32 0.0, %v398
  %v400 = vpop.f32.mrf.mxu0
  %v401 = vadd.f32 0.0, %v400
  %402 = vdwg.mxu0
  %v403 = vadd.f32 %v327, %v399
  %v404 = vadd.f32 %v328, %v401
  %v405 = vxor.u32 %v403, 2147483648
  %v406 = vxor.u32 %v404, 2147483648
  %v407 = vmul.f32 %v405, 1.442695
  %v408 = vpow.pop %v407
  %v409 = vmul.f32 %v406, 1.442695
  %v410 = vpow.pop %v409
  %v411 = vadd.f32 %v408, 1.0
  %v412 = vadd.f32 %v410, 1.0
  %v413 = vrcp.pop %v411
  %v414 = vmul.f32 1.0, %v413
  %v415 = vrcp.pop %v412
  %v416 = vmul.f32 1.0, %v415
  %v417 = vtanh.pop %v404
  %v418 = vmul.f32 %v414, %v319
  %420 = vrot.lane.b32.xlu0 %v417, 64
  %v421 = vpop.permute.xlu0 %420
  %v423 = vmul.f32 %v414, %v421
  %425 = vrot.lane.b32.xlu0 %v423, 64
  %v426 = vpop.permute.xlu0 %425
  %v428 = vadd.f32 %v418, %v426
  %v429 = vtanh.pop %v428
  %431 = vrot.lane.b32.xlu0 %v429, 64
  %v432 = vpop.permute.xlu0 %431
  %v434 = vmul.f32 %v416, %v432
  %s435 = scalar_lea.vmem [#allocation2], 32
  %v436 = vld [vmem:[%s435] sm:$0xff]
  %v437 = vld [vmem:[%s435 + $0x8] sm:$0xff]
  %v439 = vsel %vm219, %v434, 0
  %441 = vmatprep.subr.mxu0 0.0
  %442 = vmatpush1.msra.mxu0 0.0
  %443 = vmatprep.subr.mxu0 0.0
  %444 = vmatpush1.msra.mxu0 0.0
  %445 = vmatprep.subr.mxu0 0.0
  %446 = vmatpush1.msra.mxu0 0.0
  %447 = vmatprep.subr.mxu0 0.0
  %448 = vmatpush1.msra.mxu0 0.0
  %449 = vmatprep.subr.mxu0 0.0
  %450 = vmatpush1.msra.mxu0 0.0
  %451 = vmatprep.subr.mxu0 0.0
  %452 = vmatpush1.msra.mxu0 0.0
  %453 = vmatprep.subr.mxu0 0.0
  %454 = vmatpush1.msra.mxu0 0.0
  %455 = vmatprep.subr.mxu0 0.0
  %456 = vmatpush1.msra.mxu0 0.0
  %457 = vmatprep.subr.mxu0 %v218
  %458 = vmatpush1.msra.mxu0 %v217
  %459 = vmatprep.subr.mxu0 %v216
  %460 = vmatpush1.msra.mxu0 %v215
  %461 = vmatprep.subr.mxu0 %v214
  %462 = vmatpush1.msra.mxu0 %v213
  %463 = vmatprep.subr.mxu0 %v212
  %464 = vmatpush1.msra.mxu0 %v211
  %465 = vmatprep.subr.mxu0 %v210
  %466 = vmatpush1.msra.mxu0 %v209
  %467 = vmatprep.subr.mxu0 %v208
  %468 = vmatpush1.msra.mxu0 %v207
  %469 = vmatprep.subr.mxu0 %v206
  %470 = vmatpush1.msra.mxu0 %v205
  %471 = vmatprep.subr.mxu0 %v204
  %472 = vmatpush1.msra.mxu0 %v203
  %473 = vmatprep.subr.mxu0 0.0
  %474 = vmatpush2.msra.mxu0 0.0
  %475 = vmatprep.subr.mxu0 0.0
  %476 = vmatpush2.msra.mxu0 0.0
  %477 = vmatprep.subr.mxu0 0.0
  %478 = vmatpush2.msra.mxu0 0.0
  %479 = vmatprep.subr.mxu0 0.0
  %480 = vmatpush2.msra.mxu0 0.0
  %481 = vmatprep.subr.mxu0 0.0
  %482 = vmatpush2.msra.mxu0 0.0
  %483 = vmatprep.subr.mxu0 0.0
  %484 = vmatpush2.msra.mxu0 0.0
  %485 = vmatprep.subr.mxu0 0.0
  %486 = vmatpush2.msra.mxu0 0.0
  %487 = vmatprep.subr.mxu0 0.0
  %488 = vmatpush2.msra.mxu0 0.0
  %489 = vmatprep.subr.mxu0 0.0
  %490 = vmatpush2.msra.mxu0 0.0
  %491 = vmatprep.subr.mxu0 0.0
  %492 = vmatpush2.msra.mxu0 0.0
  %493 = vmatprep.subr.mxu0 0.0
  %494 = vmatpush2.msra.mxu0 0.0
  %495 = vmatprep.subr.mxu0 0.0
  %496 = vmatpush2.msra.mxu0 0.0
  %497 = vmatprep.subr.mxu0 0.0
  %498 = vmatpush2.msra.mxu0 0.0
  %499 = vmatprep.subr.mxu0 0.0
  %500 = vmatpush2.msra.mxu0 0.0
  %501 = vmatprep.subr.mxu0 0.0
  %502 = vmatpush2.msra.mxu0 0.0
  %503 = vmatprep.subr.mxu0 0.0
  %504 = vmatpush2.msra.mxu0 0.0
  %505 = vmatprep.mubr.f32.mxu0 0.0
  %506 = vmatmul.mubr.f32.gmra.mxu0 %v439
  %v507 = vpop.f32.mrf.mxu0
  %v508 = vadd.f32 0.0, %v507
  %v509 = vpop.f32.mrf.mxu0
  %v510 = vadd.f32 0.0, %v509
  %511 = vdwg.mxu0
  %v512 = vadd.f32 %v436, %v508
  %v513 = vadd.f32 %v437, %v510
  %v514 = vxor.u32 %v512, 2147483648
  %v515 = vxor.u32 %v513, 2147483648
  %v516 = vmul.f32 %v514, 1.442695
  %v517 = vpow.pop %v516
  %v518 = vmul.f32 %v515, 1.442695
  %v519 = vpow.pop %v518
  %v520 = vadd.f32 %v517, 1.0
  %v521 = vadd.f32 %v519, 1.0
  %v522 = vrcp.pop %v520
  %v523 = vmul.f32 1.0, %v522
  %v524 = vrcp.pop %v521
  %v525 = vmul.f32 1.0, %v524
  %v526 = vtanh.pop %v513
  %v527 = vmul.f32 %v523, %v428
  %529 = vrot.lane.b32.xlu0 %v526, 64
  %v530 = vpop.permute.xlu0 %529
  %v532 = vmul.f32 %v523, %v530
  %534 = vrot.lane.b32.xlu0 %v532, 64
  %v535 = vpop.permute.xlu0 %534
  %v537 = vadd.f32 %v527, %v535
  %v538 = vtanh.pop %v537
  %540 = vrot.lane.b32.xlu0 %v538, 64
  %v541 = vpop.permute.xlu0 %540
  %v543 = vmul.f32 %v525, %v541
  %s544 = scalar_lea.vmem [#allocation2], 48
  %v545 = vld [vmem:[%s544] sm:$0xff]
  %v546 = vld [vmem:[%s544 + $0x8] sm:$0xff]
  %v548 = vsel %vm219, %v543, 0
  %550 = vmatprep.subr.mxu0 0.0
  %551 = vmatpush1.msra.mxu0 0.0
  %552 = vmatprep.subr.mxu0 0.0
  %553 = vmatpush1.msra.mxu0 0.0
  %554 = vmatprep.subr.mxu0 0.0
  %555 = vmatpush1.msra.mxu0 0.0
  %556 = vmatprep.subr.mxu0 0.0
  %557 = vmatpush1.msra.mxu0 0.0
  %558 = vmatprep.subr.mxu0 0.0
  %559 = vmatpush1.msra.mxu0 0.0
  %560 = vmatprep.subr.mxu0 0.0
  %561 = vmatpush1.msra.mxu0 0.0
  %562 = vmatprep.subr.mxu0 0.0
  %563 = vmatpush1.msra.mxu0 0.0
  %564 = vmatprep.subr.mxu0 0.0
  %565 = vmatpush1.msra.mxu0 0.0
  %566 = vmatprep.subr.mxu0 %v218
  %567 = vmatpush1.msra.mxu0 %v217
  %568 = vmatprep.subr.mxu0 %v216
  %569 = vmatpush1.msra.mxu0 %v215
  %570 = vmatprep.subr.mxu0 %v214
  %571 = vmatpush1.msra.mxu0 %v213
  %572 = vmatprep.subr.mxu0 %v212
  %573 = vmatpush1.msra.mxu0 %v211
  %574 = vmatprep.subr.mxu0 %v210
  %575 = vmatpush1.msra.mxu0 %v209
  %576 = vmatprep.subr.mxu0 %v208
  %577 = vmatpush1.msra.mxu0 %v207
  %578 = vmatprep.subr.mxu0 %v206
  %579 = vmatpush1.msra.mxu0 %v205
  %580 = vmatprep.subr.mxu0 %v204
  %581 = vmatpush1.msra.mxu0 %v203
  %582 = vmatprep.subr.mxu0 0.0
  %583 = vmatpush2.msra.mxu0 0.0
  %584 = vmatprep.subr.mxu0 0.0
  %585 = vmatpush2.msra.mxu0 0.0
  %586 = vmatprep.subr.mxu0 0.0
  %587 = vmatpush2.msra.mxu0 0.0
  %588 = vmatprep.subr.mxu0 0.0
  %589 = vmatpush2.msra.mxu0 0.0
  %590 = vmatprep.subr.mxu0 0.0
  %591 = vmatpush2.msra.mxu0 0.0
  %592 = vmatprep.subr.mxu0 0.0
  %593 = vmatpush2.msra.mxu0 0.0
  %594 = vmatprep.subr.mxu0 0.0
  %595 = vmatpush2.msra.mxu0 0.0
  %596 = vmatprep.subr.mxu0 0.0
  %597 = vmatpush2.msra.mxu0 0.0
  %598 = vmatprep.subr.mxu0 0.0
  %599 = vmatpush2.msra.mxu0 0.0
  %600 = vmatprep.subr.mxu0 0.0
  %601 = vmatpush2.msra.mxu0 0.0
  %602 = vmatprep.subr.mxu0 0.0
  %603 = vmatpush2.msra.mxu0 0.0
  %604 = vmatprep.subr.mxu0 0.0
  %605 = vmatpush2.msra.mxu0 0.0
  %606 = vmatprep.subr.mxu0 0.0
  %607 = vmatpush2.msra.mxu0 0.0
  %608 = vmatprep.subr.mxu0 0.0
  %609 = vmatpush2.msra.mxu0 0.0
  %610 = vmatprep.subr.mxu0 0.0
  %611 = vmatpush2.msra.mxu0 0.0
  %612 = vmatprep.subr.mxu0 0.0
  %613 = vmatpush2.msra.mxu0 0.0
  %614 = vmatprep.mubr.f32.mxu0 0.0
  %615 = vmatmul.mubr.f32.gmra.mxu0 %v548
  %v616 = vpop.f32.mrf.mxu0
  %v617 = vadd.f32 0.0, %v616
  %v618 = vpop.f32.mrf.mxu0
  %v619 = vadd.f32 0.0, %v618
  %620 = vdwg.mxu0
  %v621 = vadd.f32 %v545, %v617
  %v622 = vadd.f32 %v546, %v619
  %v623 = vxor.u32 %v621, 2147483648
  %v624 = vxor.u32 %v622, 2147483648
  %v625 = vmul.f32 %v623, 1.442695
  %v626 = vpow.pop %v625
  %v627 = vmul.f32 %v624, 1.442695
  %v628 = vpow.pop %v627
  %v629 = vadd.f32 %v626, 1.0
  %v630 = vadd.f32 %v628, 1.0
  %v631 = vrcp.pop %v629
  %v632 = vmul.f32 1.0, %v631
  %v633 = vrcp.pop %v630
  %v634 = vmul.f32 1.0, %v633
  %v635 = vtanh.pop %v622
  %v636 = vmul.f32 %v632, %v537
  %638 = vrot.lane.b32.xlu0 %v635, 64
  %v639 = vpop.permute.xlu0 %638
  %v641 = vmul.f32 %v632, %v639
  %643 = vrot.lane.b32.xlu0 %v641, 64
  %v644 = vpop.permute.xlu0 %643
  %v646 = vadd.f32 %v636, %v644
  %v647 = vtanh.pop %v646
  %649 = vrot.lane.b32.xlu0 %v647, 64
  %v650 = vpop.permute.xlu0 %649
  %v652 = vmul.f32 %v634, %v650
  %s653 = scalar_lea.vmem [#allocation2], 64
  %v654 = vld [vmem:[%s653] sm:$0xff]
  %v655 = vld [vmem:[%s653 + $0x8] sm:$0xff]
  %v657 = vsel %vm219, %v652, 0
  %659 = vmatprep.subr.mxu0 0.0
  %660 = vmatpush1.msra.mxu0 0.0
  %661 = vmatprep.subr.mxu0 0.0
  %662 = vmatpush1.msra.mxu0 0.0
  %663 = vmatprep.subr.mxu0 0.0
  %664 = vmatpush1.msra.mxu0 0.0
  %665 = vmatprep.subr.mxu0 0.0
  %666 = vmatpush1.msra.mxu0 0.0
  %667 = vmatprep.subr.mxu0 0.0
  %668 = vmatpush1.msra.mxu0 0.0
  %669 = vmatprep.subr.mxu0 0.0
  %670 = vmatpush1.msra.mxu0 0.0
  %671 = vmatprep.subr.mxu0 0.0
  %672 = vmatpush1.msra.mxu0 0.0
  %673 = vmatprep.subr.mxu0 0.0
  %674 = vmatpush1.msra.mxu0 0.0
  %675 = vmatprep.subr.mxu0 %v218
  %676 = vmatpush1.msra.mxu0 %v217
  %677 = vmatprep.subr.mxu0 %v216
  %678 = vmatpush1.msra.mxu0 %v215
  %679 = vmatprep.subr.mxu0 %v214
  %680 = vmatpush1.msra.mxu0 %v213
  %681 = vmatprep.subr.mxu0 %v212
  %682 = vmatpush1.msra.mxu0 %v211
  %683 = vmatprep.subr.mxu0 %v210
  %684 = vmatpush1.msra.mxu0 %v209
  %685 = vmatprep.subr.mxu0 %v208
  %686 = vmatpush1.msra.mxu0 %v207
  %687 = vmatprep.subr.mxu0 %v206
  %688 = vmatpush1.msra.mxu0 %v205
  %689 = vmatprep.subr.mxu0 %v204
  %690 = vmatpush1.msra.mxu0 %v203
  %691 = vmatprep.subr.mxu0 0.0
  %692 = vmatpush2.msra.mxu0 0.0
  %693 = vmatprep.subr.mxu0 0.0
  %694 = vmatpush2.msra.mxu0 0.0
  %695 = vmatprep.subr.mxu0 0.0
  %696 = vmatpush2.msra.mxu0 0.0
  %697 = vmatprep.subr.mxu0 0.0
  %698 = vmatpush2.msra.mxu0 0.0
  %699 = vmatprep.subr.mxu0 0.0
  %700 = vmatpush2.msra.mxu0 0.0
  %701 = vmatprep.subr.mxu0 0.0
  %702 = vmatpush2.msra.mxu0 0.0
  %703 = vmatprep.subr.mxu0 0.0
  %704 = vmatpush2.msra.mxu0 0.0
  %705 = vmatprep.subr.mxu0 0.0
  %706 = vmatpush2.msra.mxu0 0.0
  %707 = vmatprep.subr.mxu0 0.0
  %708 = vmatpush2.msra.mxu0 0.0
  %709 = vmatprep.subr.mxu0 0.0
  %710 = vmatpush2.msra.mxu0 0.0
  %711 = vmatprep.subr.mxu0 0.0
  %712 = vmatpush2.msra.mxu0 0.0
  %713 = vmatprep.subr.mxu0 0.0
  %714 = vmatpush2.msra.mxu0 0.0
  %715 = vmatprep.subr.mxu0 0.0
  %716 = vmatpush2.msra.mxu0 0.0
  %717 = vmatprep.subr.mxu0 0.0
  %718 = vmatpush2.msra.mxu0 0.0
  %719 = vmatprep.subr.mxu0 0.0
  %720 = vmatpush2.msra.mxu0 0.0
  %721 = vmatprep.subr.mxu0 0.0
  %722 = vmatpush2.msra.mxu0 0.0
  %723 = vmatprep.mubr.f32.mxu0 0.0
  %724 = vmatmul.mubr.f32.gmra.mxu0 %v657
  %v725 = vpop.f32.mrf.mxu0
  %v726 = vadd.f32 0.0, %v725
  %v727 = vpop.f32.mrf.mxu0
  %v728 = vadd.f32 0.0, %v727
  %729 = vdwg.mxu0
  %v730 = vadd.f32 %v654, %v726
  %v731 = vadd.f32 %v655, %v728
  %v732 = vxor.u32 %v730, 2147483648
  %v733 = vxor.u32 %v731, 2147483648
  %v734 = vmul.f32 %v732, 1.442695
  %v735 = vpow.pop %v734
  %v736 = vmul.f32 %v733, 1.442695
  %v737 = vpow.pop %v736
  %v738 = vadd.f32 %v735, 1.0
  %v739 = vadd.f32 %v737, 1.0
  %v740 = vrcp.pop %v738
  %v741 = vmul.f32 1.0, %v740
  %v742 = vrcp.pop %v739
  %v743 = vmul.f32 1.0, %v742
  %v744 = vtanh.pop %v731
  %v745 = vmul.f32 %v741, %v646
  %747 = vrot.lane.b32.xlu0 %v744, 64
  %v748 = vpop.permute.xlu0 %747
  %v750 = vmul.f32 %v741, %v748
  %752 = vrot.lane.b32.xlu0 %v750, 64
  %v753 = vpop.permute.xlu0 %752
  %v755 = vadd.f32 %v745, %v753
  %v756 = vtanh.pop %v755
  %758 = vrot.lane.b32.xlu0 %v756, 64
  %v759 = vpop.permute.xlu0 %758
  %v761 = vmul.f32 %v743, %v759
  %s762 = scalar_lea.vmem [#allocation2], 80
  %v763 = vld [vmem:[%s762] sm:$0xff]
  %v764 = vld [vmem:[%s762 + $0x8] sm:$0xff]
  %v766 = vsel %vm219, %v761, 0
  %768 = vmatprep.subr.mxu0 0.0
  %769 = vmatpush1.msra.mxu0 0.0
  %770 = vmatprep.subr.mxu0 0.0
  %771 = vmatpush1.msra.mxu0 0.0
  %772 = vmatprep.subr.mxu0 0.0
  %773 = vmatpush1.msra.mxu0 0.0
  %774 = vmatprep.subr.mxu0 0.0
  %775 = vmatpush1.msra.mxu0 0.0
  %776 = vmatprep.subr.mxu0 0.0
  %777 = vmatpush1.msra.mxu0 0.0
  %778 = vmatprep.subr.mxu0 0.0
  %779 = vmatpush1.msra.mxu0 0.0
  %780 = vmatprep.subr.mxu0 0.0
  %781 = vmatpush1.msra.mxu0 0.0
  %782 = vmatprep.subr.mxu0 0.0
  %783 = vmatpush1.msra.mxu0 0.0
  %784 = vmatprep.subr.mxu0 %v218
  %785 = vmatpush1.msra.mxu0 %v217
  %786 = vmatprep.subr.mxu0 %v216
  %787 = vmatpush1.msra.mxu0 %v215
  %788 = vmatprep.subr.mxu0 %v214
  %789 = vmatpush1.msra.mxu0 %v213
  %790 = vmatprep.subr.mxu0 %v212
  %791 = vmatpush1.msra.mxu0 %v211
  %792 = vmatprep.subr.mxu0 %v210
  %793 = vmatpush1.msra.mxu0 %v209
  %794 = vmatprep.subr.mxu0 %v208
  %795 = vmatpush1.msra.mxu0 %v207
  %796 = vmatprep.subr.mxu0 %v206
  %797 = vmatpush1.msra.mxu0 %v205
  %798 = vmatprep.subr.mxu0 %v204
  %799 = vmatpush1.msra.mxu0 %v203
  %800 = vmatprep.subr.mxu0 0.0
  %801 = vmatpush2.msra.mxu0 0.0
  %802 = vmatprep.subr.mxu0 0.0
  %803 = vmatpush2.msra.mxu0 0.0
  %804 = vmatprep.subr.mxu0 0.0
  %805 = vmatpush2.msra.mxu0 0.0
  %806 = vmatprep.subr.mxu0 0.0
  %807 = vmatpush2.msra.mxu0 0.0
  %808 = vmatprep.subr.mxu0 0.0
  %809 = vmatpush2.msra.mxu0 0.0
  %810 = vmatprep.subr.mxu0 0.0
  %811 = vmatpush2.msra.mxu0 0.0
  %812 = vmatprep.subr.mxu0 0.0
  %813 = vmatpush2.msra.mxu0 0.0
  %814 = vmatprep.subr.mxu0 0.0
  %815 = vmatpush2.msra.mxu0 0.0
  %816 = vmatprep.subr.mxu0 0.0
  %817 = vmatpush2.msra.mxu0 0.0
  %818 = vmatprep.subr.mxu0 0.0
  %819 = vmatpush2.msra.mxu0 0.0
  %820 = vmatprep.subr.mxu0 0.0
  %821 = vmatpush2.msra.mxu0 0.0
  %822 = vmatprep.subr.mxu0 0.0
  %823 = vmatpush2.msra.mxu0 0.0
  %824 = vmatprep.subr.mxu0 0.0
  %825 = vmatpush2.msra.mxu0 0.0
  %826 = vmatprep.subr.mxu0 0.0
  %827 = vmatpush2.msra.mxu0 0.0
  %828 = vmatprep.subr.mxu0 0.0
  %829 = vmatpush2.msra.mxu0 0.0
  %830 = vmatprep.subr.mxu0 0.0
  %831 = vmatpush2.msra.mxu0 0.0
  %832 = vmatprep.mubr.f32.mxu0 0.0
  %833 = vmatmul.mubr.f32.gmra.mxu0 %v766
  %v834 = vpop.f32.mrf.mxu0
  %v835 = vadd.f32 0.0, %v834
  %v836 = vpop.f32.mrf.mxu0
  %v837 = vadd.f32 0.0, %v836
  %838 = vdwg.mxu0
  %v839 = vadd.f32 %v763, %v835
  %v840 = vadd.f32 %v764, %v837
  %v841 = vxor.u32 %v839, 2147483648
  %v842 = vxor.u32 %v840, 2147483648
  %v843 = vmul.f32 %v841, 1.442695
  %v844 = vpow.pop %v843
  %v845 = vmul.f32 %v842, 1.442695
  %v846 = vpow.pop %v845
  %v847 = vadd.f32 %v844, 1.0
  %v848 = vadd.f32 %v846, 1.0
  %v849 = vrcp.pop %v847
  %v850 = vmul.f32 1.0, %v849
  %v851 = vrcp.pop %v848
  %v852 = vmul.f32 1.0, %v851
  %v853 = vtanh.pop %v840
  %v854 = vmul.f32 %v850, %v755
  %856 = vrot.lane.b32.xlu0 %v853, 64
  %v857 = vpop.permute.xlu0 %856
  %v859 = vmul.f32 %v850, %v857
  %861 = vrot.lane.b32.xlu0 %v859, 64
  %v862 = vpop.permute.xlu0 %861
  %v864 = vadd.f32 %v854, %v862
  %v865 = vtanh.pop %v864
  %867 = vrot.lane.b32.xlu0 %v865, 64
  %v868 = vpop.permute.xlu0 %867
  %v870 = vmul.f32 %v852, %v868
  %s871 = scalar_lea.vmem [#allocation2], 96
  %v872 = vld [vmem:[%s871] sm:$0xff]
  %v873 = vld [vmem:[%s871 + $0x8] sm:$0xff]
  %v875 = vsel %vm219, %v870, 0
  %877 = vmatprep.subr.mxu0 0.0
  %878 = vmatpush1.msra.mxu0 0.0
  %879 = vmatprep.subr.mxu0 0.0
  %880 = vmatpush1.msra.mxu0 0.0
  %881 = vmatprep.subr.mxu0 0.0
  %882 = vmatpush1.msra.mxu0 0.0
  %883 = vmatprep.subr.mxu0 0.0
  %884 = vmatpush1.msra.mxu0 0.0
  %885 = vmatprep.subr.mxu0 0.0
  %886 = vmatpush1.msra.mxu0 0.0
  %887 = vmatprep.subr.mxu0 0.0
  %888 = vmatpush1.msra.mxu0 0.0
  %889 = vmatprep.subr.mxu0 0.0
  %890 = vmatpush1.msra.mxu0 0.0
  %891 = vmatprep.subr.mxu0 0.0
  %892 = vmatpush1.msra.mxu0 0.0
  %893 = vmatprep.subr.mxu0 %v218
  %894 = vmatpush1.msra.mxu0 %v217
  %895 = vmatprep.subr.mxu0 %v216
  %896 = vmatpush1.msra.mxu0 %v215
  %897 = vmatprep.subr.mxu0 %v214
  %898 = vmatpush1.msra.mxu0 %v213
  %899 = vmatprep.subr.mxu0 %v212
  %900 = vmatpush1.msra.mxu0 %v211
  %901 = vmatprep.subr.mxu0 %v210
  %902 = vmatpush1.msra.mxu0 %v209
  %903 = vmatprep.subr.mxu0 %v208
  %904 = vmatpush1.msra.mxu0 %v207
  %905 = vmatprep.subr.mxu0 %v206
  %906 = vmatpush1.msra.mxu0 %v205
  %907 = vmatprep.subr.mxu0 %v204
  %908 = vmatpush1.msra.mxu0 %v203
  %909 = vmatprep.subr.mxu0 0.0
  %910 = vmatpush2.msra.mxu0 0.0
  %911 = vmatprep.subr.mxu0 0.0
  %912 = vmatpush2.msra.mxu0 0.0
  %913 = vmatprep.subr.mxu0 0.0
  %914 = vmatpush2.msra.mxu0 0.0
  %915 = vmatprep.subr.mxu0 0.0
  %916 = vmatpush2.msra.mxu0 0.0
  %917 = vmatprep.subr.mxu0 0.0
  %918 = vmatpush2.msra.mxu0 0.0
  %919 = vmatprep.subr.mxu0 0.0
  %920 = vmatpush2.msra.mxu0 0.0
  %921 = vmatprep.subr.mxu0 0.0
  %922 = vmatpush2.msra.mxu0 0.0
  %923 = vmatprep.subr.mxu0 0.0
  %924 = vmatpush2.msra.mxu0 0.0
  %925 = vmatprep.subr.mxu0 0.0
  %926 = vmatpush2.msra.mxu0 0.0
  %927 = vmatprep.subr.mxu0 0.0
  %928 = vmatpush2.msra.mxu0 0.0
  %929 = vmatprep.subr.mxu0 0.0
  %930 = vmatpush2.msra.mxu0 0.0
  %931 = vmatprep.subr.mxu0 0.0
  %932 = vmatpush2.msra.mxu0 0.0
  %933 = vmatprep.subr.mxu0 0.0
  %934 = vmatpush2.msra.mxu0 0.0
  %935 = vmatprep.subr.mxu0 0.0
  %936 = vmatpush2.msra.mxu0 0.0
  %937 = vmatprep.subr.mxu0 0.0
  %938 = vmatpush2.msra.mxu0 0.0
  %939 = vmatprep.subr.mxu0 0.0
  %940 = vmatpush2.msra.mxu0 0.0
  %941 = vmatprep.mubr.f32.mxu0 0.0
  %942 = vmatmul.mubr.f32.gmra.mxu0 %v875
  %v943 = vpop.f32.mrf.mxu0
  %v944 = vadd.f32 0.0, %v943
  %v945 = vpop.f32.mrf.mxu0
  %v946 = vadd.f32 0.0, %v945
  %947 = vdwg.mxu0
  %v948 = vadd.f32 %v872, %v944
  %v949 = vadd.f32 %v873, %v946
  %v950 = vxor.u32 %v948, 2147483648
  %v951 = vxor.u32 %v949, 2147483648
  %v952 = vmul.f32 %v950, 1.442695
  %v953 = vpow.pop %v952
  %v954 = vmul.f32 %v951, 1.442695
  %v955 = vpow.pop %v954
  %v956 = vadd.f32 %v953, 1.0
  %v957 = vadd.f32 %v955, 1.0
  %v958 = vrcp.pop %v956
  %v959 = vmul.f32 1.0, %v958
  %v960 = vrcp.pop %v957
  %v961 = vmul.f32 1.0, %v960
  %v962 = vtanh.pop %v949
  %v963 = vmul.f32 %v959, %v864
  %965 = vrot.lane.b32.xlu0 %v962, 64
  %v966 = vpop.permute.xlu0 %965
  %v968 = vmul.f32 %v959, %v966
  %970 = vrot.lane.b32.xlu0 %v968, 64
  %v971 = vpop.permute.xlu0 %970
  %v973 = vadd.f32 %v963, %v971
  %v974 = vtanh.pop %v973
  %976 = vrot.lane.b32.xlu0 %v974, 64
  %v977 = vpop.permute.xlu0 %976
  %v979 = vmul.f32 %v961, %v977
  %s980 = scalar_lea.vmem [#allocation2], 112
  %v981 = vld [vmem:[%s980] sm:$0xff]
  %v982 = vld [vmem:[%s980 + $0x8] sm:$0xff]
  %v984 = vsel %vm219, %v979, 0
  %986 = vmatprep.subr.mxu0 0.0
  %987 = vmatpush1.msra.mxu0 0.0
  %988 = vmatprep.subr.mxu0 0.0
  %989 = vmatpush1.msra.mxu0 0.0
  %990 = vmatprep.subr.mxu0 0.0
  %991 = vmatpush1.msra.mxu0 0.0
  %992 = vmatprep.subr.mxu0 0.0
  %993 = vmatpush1.msra.mxu0 0.0
  %994 = vmatprep.subr.mxu0 0.0
  %995 = vmatpush1.msra.mxu0 0.0
  %996 = vmatprep.subr.mxu0 0.0
  %997 = vmatpush1.msra.mxu0 0.0
  %998 = vmatprep.subr.mxu0 0.0
  %999 = vmatpush1.msra.mxu0 0.0
  %1000 = vmatprep.subr.mxu0 0.0
  %1001 = vmatpush1.msra.mxu0 0.0
  %1002 = vmatprep.subr.mxu0 %v218
  %1003 = vmatpush1.msra.mxu0 %v217
  %1004 = vmatprep.subr.mxu0 %v216
  %1005 = vmatpush1.msra.mxu0 %v215
  %1006 = vmatprep.subr.mxu0 %v214
  %1007 = vmatpush1.msra.mxu0 %v213
  %1008 = vmatprep.subr.mxu0 %v212
  %1009 = vmatpush1.msra.mxu0 %v211
  %1010 = vmatprep.subr.mxu0 %v210
  %1011 = vmatpush1.msra.mxu0 %v209
  %1012 = vmatprep.subr.mxu0 %v208
  %1013 = vmatpush1.msra.mxu0 %v207
  %1014 = vmatprep.subr.mxu0 %v206
  %1015 = vmatpush1.msra.mxu0 %v205
  %1016 = vmatprep.subr.mxu0 %v204
  %1017 = vmatpush1.msra.mxu0 %v203
  %1018 = vmatprep.subr.mxu0 0.0
  %1019 = vmatpush2.msra.mxu0 0.0
  %1020 = vmatprep.subr.mxu0 0.0
  %1021 = vmatpush2.msra.mxu0 0.0
  %1022 = vmatprep.subr.mxu0 0.0
  %1023 = vmatpush2.msra.mxu0 0.0
  %1024 = vmatprep.subr.mxu0 0.0
  %1025 = vmatpush2.msra.mxu0 0.0
  %1026 = vmatprep.subr.mxu0 0.0
  %1027 = vmatpush2.msra.mxu0 0.0
  %1028 = vmatprep.subr.mxu0 0.0
  %1029 = vmatpush2.msra.mxu0 0.0
  %1030 = vmatprep.subr.mxu0 0.0
  %1031 = vmatpush2.msra.mxu0 0.0
  %1032 = vmatprep.subr.mxu0 0.0
  %1033 = vmatpush2.msra.mxu0 0.0
  %1034 = vmatprep.subr.mxu0 0.0
  %1035 = vmatpush2.msra.mxu0 0.0
  %1036 = vmatprep.subr.mxu0 0.0
  %1037 = vmatpush2.msra.mxu0 0.0
  %1038 = vmatprep.subr.mxu0 0.0
  %1039 = vmatpush2.msra.mxu0 0.0
  %1040 = vmatprep.subr.mxu0 0.0
  %1041 = vmatpush2.msra.mxu0 0.0
  %1042 = vmatprep.subr.mxu0 0.0
  %1043 = vmatpush2.msra.mxu0 0.0
  %1044 = vmatprep.subr.mxu0 0.0
  %1045 = vmatpush2.msra.mxu0 0.0
  %1046 = vmatprep.subr.mxu0 0.0
  %1047 = vmatpush2.msra.mxu0 0.0
  %1048 = vmatprep.subr.mxu0 0.0
  %1049 = vmatpush2.msra.mxu0 0.0
  %1050 = vmatprep.mubr.f32.mxu0 0.0
  %1051 = vmatmul.mubr.f32.gmra.mxu0 %v984
  %v1052 = vpop.f32.mrf.mxu0
  %v1053 = vadd.f32 0.0, %v1052
  %v1054 = vpop.f32.mrf.mxu0
  %v1055 = vadd.f32 0.0, %v1054
  %1056 = vdwg.mxu0
  %v1057 = vadd.f32 %v981, %v1053
  %v1058 = vadd.f32 %v982, %v1055
  %v1059 = vxor.u32 %v1057, 2147483648
  %v1060 = vxor.u32 %v1058, 2147483648
  %v1061 = vmul.f32 %v1059, 1.442695
  %v1062 = vpow.pop %v1061
  %v1063 = vmul.f32 %v1060, 1.442695
  %v1064 = vpow.pop %v1063
  %v1065 = vadd.f32 %v1062, 1.0
  %v1066 = vadd.f32 %v1064, 1.0
  %v1067 = vrcp.pop %v1065
  %v1068 = vmul.f32 1.0, %v1067
  %v1069 = vrcp.pop %v1066
  %v1070 = vmul.f32 1.0, %v1069
  %v1071 = vtanh.pop %v1058
  %v1072 = vmul.f32 %v1068, %v973
  %1074 = vrot.lane.b32.xlu0 %v1071, 64
  %v1075 = vpop.permute.xlu0 %1074
  %v1077 = vmul.f32 %v1068, %v1075
  %1079 = vrot.lane.b32.xlu0 %v1077, 64
  %v1080 = vpop.permute.xlu0 %1079
  %v1082 = vadd.f32 %v1072, %v1080
  %v1083 = vtanh.pop %v1082
  %1085 = vrot.lane.b32.xlu0 %v1083, 64
  %v1086 = vpop.permute.xlu0 %1085
  %v1088 = vmul.f32 %v1070, %v1086
  %v1089 = vld [vmem:[%s4] sm:$0xff]
  %v1090 = vld [vmem:[%s4 + $0x8] sm:$0xff]
  %v1091 = vld [vmem:[%s4 + $0x10] sm:$0xff]
  %v1092 = vld [vmem:[%s4 + $0x18] sm:$0xff]
  %v1093 = vld [vmem:[%s4 + $0x20] sm:$0xff]
  %v1094 = vld [vmem:[%s4 + $0x28] sm:$0xff]
  %v1095 = vld [vmem:[%s4 + $0x30] sm:$0xff]
  %v1096 = vld [vmem:[%s4 + $0x38] sm:$0xff]
  %v1097 = vld [vmem:[%s5] sm:$0x1]
  %v1099 = vlaneseq
  %v1100 = vshrl.u32 %v1099, 7
  %v1101 = vsub.s32 0, %v1100
  %v1102 = vrot.slane %v1097, %v1101
  %v1105 = vsel %vm219, %v1088, 0
  %1107 = vmatprep.subr.mxu0 0.0
  %1108 = vmatpush1.msra.mxu0 0.0
  %1109 = vmatprep.subr.mxu0 0.0
  %1110 = vmatpush1.msra.mxu0 0.0
  %1111 = vmatprep.subr.mxu0 0.0
  %1112 = vmatpush1.msra.mxu0 0.0
  %1113 = vmatprep.subr.mxu0 0.0
  %1114 = vmatpush1.msra.mxu0 0.0
  %1115 = vmatprep.subr.mxu0 0.0
  %1116 = vmatpush1.msra.mxu0 0.0
  %1117 = vmatprep.subr.mxu0 0.0
  %1118 = vmatpush1.msra.mxu0 0.0
  %1119 = vmatprep.subr.mxu0 0.0
  %1120 = vmatpush1.msra.mxu0 0.0
  %1121 = vmatprep.subr.mxu0 0.0
  %1122 = vmatpush1.msra.mxu0 0.0
  %1123 = vmatprep.subr.mxu0 0.0
  %1124 = vmatpush1.msra.mxu0 %v1096
  %1125 = vmatprep.subr.mxu0 0.0
  %1126 = vmatpush1.msra.mxu0 %v1095
  %1127 = vmatprep.subr.mxu0 0.0
  %1128 = vmatpush1.msra.mxu0 %v1094
  %1129 = vmatprep.subr.mxu0 0.0
  %1130 = vmatpush1.msra.mxu0 %v1093
  %1131 = vmatprep.subr.mxu0 0.0
  %1132 = vmatpush1.msra.mxu0 %v1092
  %1133 = vmatprep.subr.mxu0 0.0
  %1134 = vmatpush1.msra.mxu0 %v1091
  %1135 = vmatprep.subr.mxu0 0.0
  %1136 = vmatpush1.msra.mxu0 %v1090
  %1137 = vmatprep.subr.mxu0 0.0
  %1138 = vmatpush1.msra.mxu0 %v1089
  %1139 = vmatprep.subr.mxu0 0.0
  %1140 = vmatpush2.msra.mxu0 0.0
  %1141 = vmatprep.subr.mxu0 0.0
  %1142 = vmatpush2.msra.mxu0 0.0
  %1143 = vmatprep.subr.mxu0 0.0
  %1144 = vmatpush2.msra.mxu0 0.0
  %1145 = vmatprep.subr.mxu0 0.0
  %1146 = vmatpush2.msra.mxu0 0.0
  %1147 = vmatprep.subr.mxu0 0.0
  %1148 = vmatpush2.msra.mxu0 0.0
  %1149 = vmatprep.subr.mxu0 0.0
  %1150 = vmatpush2.msra.mxu0 0.0
  %1151 = vmatprep.subr.mxu0 0.0
  %1152 = vmatpush2.msra.mxu0 0.0
  %1153 = vmatprep.subr.mxu0 0.0
  %1154 = vmatpush2.msra.mxu0 0.0
  %1155 = vmatprep.subr.mxu0 0.0
  %1156 = vmatpush2.msra.mxu0 0.0
  %1157 = vmatprep.subr.mxu0 0.0
  %1158 = vmatpush2.msra.mxu0 0.0
  %1159 = vmatprep.subr.mxu0 0.0
  %1160 = vmatpush2.msra.mxu0 0.0
  %1161 = vmatprep.subr.mxu0 0.0
  %1162 = vmatpush2.msra.mxu0 0.0
  %1163 = vmatprep.subr.mxu0 0.0
  %1164 = vmatpush2.msra.mxu0 0.0
  %1165 = vmatprep.subr.mxu0 0.0
  %1166 = vmatpush2.msra.mxu0 0.0
  %1167 = vmatprep.subr.mxu0 0.0
  %1168 = vmatpush2.msra.mxu0 0.0
  %1169 = vmatprep.subr.mxu0 0.0
  %1170 = vmatpush2.msra.mxu0 0.0
  %1171 = vmatprep.mubr.f32.mxu0 0.0
  %1172 = vmatmul.mubr.f32.gmra.mxu0 %v1105
  %v1173 = vpop.f32.mrf.mxu0
  %v1174 = vadd.f32 %v1102, %v1173
  %v1175 = vpop.f32.mrf.mxu0
  %1176 = vdwg.mxu0
  %vm1177 = vcmask 31744
  %1178 = vst.msk [vmem:[%s6] sm:$0xff] %vm1177, %v1174
  // Predicated region
  $region26: #{simple_rnn_reward_forward.1} parent=0 // pred_check
    _
  $region27: #{simple_rnn_reward_forward.1} parent=0 // pred_check_branch
    %1180 = sbr.rel (0) target = $region29
  $region28: #{simple_rnn_reward_forward.1} parent=0 // pred_region
    _
  $region29: #{simple_rnn_reward_forward.1} parent=0 // pred_fallthru
    _
  // Predicated region
  $region30: #{simple_rnn_reward_forward.1} parent=0 // pred_check
    _
  $region31: #{simple_rnn_reward_forward.1} parent=0 // pred_check_branch
    %1182 = sbr.rel (0) target = $region33
  $region32: #{simple_rnn_reward_forward.1} parent=0 // pred_region
    _
  $region33: #{simple_rnn_reward_forward.1} parent=0 // pred_fallthru
    _

</llo_original>
